<compile_context>
chip_gen: v7x
topology: tpu7x:2x2x1
jax: 0.10.0
libtpu: 0.0.40
codegen_flags: <defaults>
</compile_context>

<pallas_src>
import functools

import jax
import jax.numpy as jnp
from jax.experimental import pallas as pl
from jax.experimental.pallas import tpu as pltpu


def _round_up(n, m):
    return ((n + m - 1) // m) * m


def _cdiv(a, b):
    return -(-a // b)


def _vmem_budget_bytes():
    """~85% of per-core VMEM (≈54 MiB on v7x, ≈109 MiB on v5e/v6e)."""
    try:
        cap = int(pltpu.get_tpu_info().vmem_capacity_bytes)
    except Exception:
        cap = 64 * 1024 * 1024          # conservative (v7x-sized) fallback
    return int(cap * 0.85)


def _choose_batch_tile(B, tb_cap):
    """16-aligned batch tile: >=2 grid steps when B allows (2-TC chips),
    near-even split to minimize ragged-batch padding, never above tb_cap."""
    tb_cap = max(16, (tb_cap // 16) * 16)
    min_steps = 2 if B >= 32 else 1
    steps = max(_cdiv(B, tb_cap), min_steps)
    tb = min(_round_up(_cdiv(B, steps), 16), tb_cap)
    steps = _cdiv(B, tb)
    return tb, steps * tb


# --------------------------------------------------------------------------
# Fused (weights-resident) path: one kernel does fc1+ReLU -> fc2+ReLU -> fc3.
# --------------------------------------------------------------------------
def _bm_fused_kernel(x_ref, w1_ref, b1_ref, w2_ref, b2_ref, w3_ref, b3_ref,
                     o_ref):
    cd = w1_ref.dtype                       # MXU compute dtype (bf16)
    # fc1 + ReLU: cast the fp32 x tile in-body (no wrapper-side cast traffic)
    h = jnp.dot(x_ref[...].astype(cd), w1_ref[...],
                preferred_element_type=jnp.float32)
    h = jnp.maximum(h + b1_ref[...], 0.0)
    # fc2 + ReLU
    h = jnp.dot(h.astype(cd), w2_ref[...], preferred_element_type=jnp.float32)
    h = jnp.maximum(h + b2_ref[...], 0.0)
    # fc3 (linear output)
    h = jnp.dot(h.astype(cd), w3_ref[...], preferred_element_type=jnp.float32)
    o_ref[...] = (h + b3_ref[...]).astype(o_ref.dtype)


# --------------------------------------------------------------------------
# Weight-streaming fallback (large D): tiled matmul with fused bias(+ReLU)
# epilogue, reduction axis last, accumulator init/finalize via pl.when.
# --------------------------------------------------------------------------
def _linear_kernel(x_ref, w_ref, b_ref, o_ref, acc_ref, *, relu):
    @pl.when(pl.program_id(2) == 0)
    def _():
        acc_ref[...] = jnp.zeros_like(acc_ref)

    acc_ref[...] += jnp.dot(x_ref[...].astype(w_ref.dtype), w_ref[...],
                            preferred_element_type=jnp.float32)

    @pl.when(pl.program_id(2) == pl.num_programs(2) - 1)
    def _():
        y = acc_ref[...] + b_ref[...]
        if relu:
            y = jnp.maximum(y, 0.0)
        o_ref[...] = y.astype(o_ref.dtype)


def _tiled_linear(x, w, b, *, relu, out_dtype, tm, tn, tk, vmem_limit):
    M, K = x.shape
    N = w.shape[1]
    mpad = _round_up(M, tm)
    xp = jnp.pad(x, ((0, mpad - M), (0, 0))) if mpad != M else x
    out = pl.pallas_call(
        functools.partial(_linear_kernel, relu=relu),
        out_shape=jax.ShapeDtypeStruct((mpad, N), out_dtype),
        grid_spec=pltpu.PrefetchScalarGridSpec(
            num_scalar_prefetch=0,
            grid=(mpad // tm, N // tn, K // tk),
            in_specs=[
                pl.BlockSpec((tm, tk), lambda i, j, k: (i, k)),
                pl.BlockSpec((tk, tn), lambda i, j, k: (k, j)),
                pl.BlockSpec((1, tn), lambda i, j, k: (0, j)),
            ],
            out_specs=pl.BlockSpec((tm, tn), lambda i, j, k: (i, j)),
            scratch_shapes=[pltpu.VMEM((tm, tn), jnp.float32)],
        ),
        compiler_params=pltpu.CompilerParams(
            dimension_semantics=("parallel", "parallel", "arbitrary"),
            vmem_limit_bytes=int(vmem_limit),
        ),
        cost_estimate=pl.CostEstimate(
            flops=int(2 * mpad * N * K),
            transcendentals=0,
            bytes_accessed=int(xp.size * xp.dtype.itemsize
                               + w.size * w.dtype.itemsize + b.size * 4
                               + mpad * N * jnp.dtype(out_dtype).itemsize),
        ),
    )(xp, w, b)
    return out[:M] if mpad != M else out


# --------------------------------------------------------------------------
# Public forward
# --------------------------------------------------------------------------
def boltzmann_machine_forward(x, params, *, tb=1024, out_dtype=jnp.float32,
                              compute_dtype=jnp.bfloat16,
                              force_streaming=False, stream_tiles=None):
    """Fused forward pass of the BoltzmannMachine.

    x:      (B, D) float32
    params: dict with w1..w3 of shape (D, D) in (in, out) layout and b1..b3 of
            shape (1, D).  Pass prepare_params(...) output so weights are
            already in compute_dtype (no per-call cast traffic).
    """
    B, D = x.shape

    # asarray is a no-op when dtypes already match (prepare_params path).
    w1 = jnp.asarray(params["w1"], compute_dtype)
    w2 = jnp.asarray(params["w2"], compute_dtype)
    w3 = jnp.asarray(params["w3"], compute_dtype)
    b1 = jnp.asarray(params["b1"], jnp.float32)
    b2 = jnp.asarray(params["b2"], jnp.float32)
    b3 = jnp.asarray(params["b3"], jnp.float32)

    cap = _vmem_budget_bytes()
    w_item = jnp.dtype(compute_dtype).itemsize
    o_item = jnp.dtype(out_dtype).itemsize
    weight_bytes = 3 * D * D * w_item + 3 * D * 4
    # per batch-row VMEM: x (2 bufs fp32) + out (2 bufs) + fp32/bf16 act scratch
    per_row = D * (2 * 4 + 2 * o_item + 3 * 4 + 2 * w_item)
    resident_ok = (not force_streaming) and (weight_bytes + 64 * per_row <= cap)

    if resident_ok:
        tb_cap = min(tb, max(16, (cap - weight_bytes) // per_row))
        tb_eff, b_pad = _choose_batch_tile(B, tb_cap)
        xp = jnp.pad(x, ((0, b_pad - B), (0, 0))) if b_pad != B else x

        cost = pl.CostEstimate(
            flops=int(3 * 2 * b_pad * D * D),
            transcendentals=0,
            bytes_accessed=int(b_pad * D * 4 + weight_bytes
                               + b_pad * D * o_item),
        )

        resident = pl.BlockSpec(memory_space=pltpu.MemorySpace.VMEM)
        out = pl.pallas_call(
            _bm_fused_kernel,
            out_shape=jax.ShapeDtypeStruct((b_pad, D), out_dtype),
            grid_spec=pltpu.PrefetchScalarGridSpec(
                num_scalar_prefetch=0,
                grid=(b_pad // tb_eff,),
                in_specs=[
                    pl.BlockSpec((tb_eff, D), lambda i: (i, 0)),
                    resident, resident,      # fc1: w1, b1
                    resident, resident,      # fc2: w2, b2
                    resident, resident,      # fc3: w3, b3
                ],
                out_specs=pl.BlockSpec((tb_eff, D), lambda i: (i, 0)),
            ),
            compiler_params=pltpu.CompilerParams(
                dimension_semantics=("parallel",),
                vmem_limit_bytes=int(cap),
            ),
            cost_estimate=cost,
        )(xp, w1, b1, w2, b2, w3, b3)
        return out[:B] if b_pad != B else out

    # ---- large-D fallback: stream weight tiles (per-layer tiled matmuls) ----
    # TODO(synk): a single fused streaming kernel (all three layers in one
    # pallas_call with per-layer N/K tiling) would avoid the HBM round trip of
    # the intermediate activations; with bf16 intermediates it is minor.
    if stream_tiles is not None:
        tm, tn, tk = stream_tiles
    else:
        tn = tk = next((t for t in (512, 256, 128) if D % t == 0), D)
        tm, _ = _choose_batch_tile(B, 256)
    h = _tiled_linear(x, w1, b1, relu=True, out_dtype=compute_dtype,
                      tm=tm, tn=tn, tk=tk, vmem_limit=cap)
    h = _tiled_linear(h, w2, b2, relu=True, out_dtype=compute_dtype,
                      tm=tm, tn=tn, tk=tk, vmem_limit=cap)
    return _tiled_linear(h, w3, b3, relu=False, out_dtype=out_dtype,
                         tm=tm, tn=tn, tk=tk, vmem_limit=cap)


# --------------------------------------------------------------------------
# Parameter helpers / reference
# --------------------------------------------------------------------------
def init_params(key, input_size):
    """Deterministic init mirroring nn.Linear default (uniform +/- 1/sqrt(in)),
    stored directly in the (in, out) layout used by the kernel."""
    bound = 1.0 / jnp.sqrt(jnp.float32(input_size))
    keys = jax.random.split(key, 6)

    def u(k, shape):
        return jax.random.uniform(k, shape, jnp.float32, -bound, bound)

    return {
        "w1": u(keys[0], (input_size, input_size)),
        "b1": u(keys[1], (1, input_size)),
        "w2": u(keys[2], (input_size, input_size)),
        "b2": u(keys[3], (1, input_size)),
        "w3": u(keys[4], (input_size, input_size)),
        "b3": u(keys[5], (1, input_size)),
    }


def prepare_params(params, compute_dtype=jnp.bfloat16):
    """One-time conversion of fp32 master weights to the MXU compute dtype
    (avoids re-casting 3*D^2 weights over HBM on every forward call)."""
    out = {}
    for i in (1, 2, 3):
        out[f"w{i}"] = jnp.asarray(params[f"w{i}"], compute_dtype)
        out[f"b{i}"] = jnp.asarray(params[f"b{i}"], jnp.float32)
    return out


def _reference(x, p, compute_dtype=jnp.bfloat16):
    """Pure-JAX reference matching the kernel's bf16-operand / fp32-accum math."""
    c = compute_dtype
    w1, w2, w3 = (jnp.asarray(p[k], c) for k in ("w1", "w2", "w3"))
    b1, b2, b3 = (jnp.asarray(p[k], jnp.float32) for k in ("b1", "b2", "b3"))
    h = jnp.dot(x.astype(c), w1, preferred_element_type=jnp.float32)
    h = jnp.maximum(h + b1, 0.0)
    h = jnp.dot(h.astype(c), w2, preferred_element_type=jnp.float32)
    h = jnp.maximum(h + b2, 0.0)
    h = jnp.dot(h.astype(c), w3, preferred_element_type=jnp.float32)
    return h + b3


if __name__ == "__main__":
    key = jax.random.PRNGKey(0)
    k_x1, k_x2, k_x3, k_p1, k_p2 = jax.random.split(key, 5)

    # NOTE: get_coupler_dict() from the PyTorch module is host-side parameter
    # introspection (not part of forward) and is intentionally not ported.

    input_size = 128                       # lane-aligned feature dim
    params = prepare_params(init_params(k_p1, input_size))

    fwd = jax.jit(boltzmann_machine_forward)

    # small batch: single grid step, tile shrinks to a 16-aligned batch
    x_small = jax.random.normal(k_x1, (8, input_size), jnp.float32)
    out_small = jax.block_until_ready(fwd(x_small, params))
    ref_small = _reference(x_small, params)
    assert out_small.shape == x_small.shape
    assert out_small.dtype == jnp.float32
    assert jnp.allclose(out_small, ref_small, atol=1e-2, rtol=1e-2)

    # ragged batch: exercises padding + 2-step parallel grid (both v7x cores)
    x_rag = jax.random.normal(k_x2, (200, input_size), jnp.float32)
    out_rag = jax.block_until_ready(fwd(x_rag, params))
    ref_rag = _reference(x_rag, params)
    assert out_rag.shape == x_rag.shape
    assert jnp.allclose(out_rag, ref_rag, atol=1e-2, rtol=1e-2)

    # weight-streaming fallback path (forced, small D=256 with 128-wide tiles
    # so the reduction grid axis really has >1 step)
    params_s = prepare_params(init_params(k_p2, 256))
    x_s = jax.random.normal(k_x3, (40, 256), jnp.float32)
    out_s = jax.block_until_ready(
        boltzmann_machine_forward(x_s, params_s, force_streaming=True,
                                  stream_tiles=(16, 128, 128)))
    ref_s = _reference(x_s, params_s)
    assert out_s.shape == x_s.shape
    assert jnp.allclose(out_s, ref_s, atol=2e-2, rtol=2e-2)

    print("KERNEL_OK")
</pallas_src>

<mosaic_0001>
module attributes {stable_mosaic.version = 11 : i64} {
  func.func @_bm_fused_kernel(%arg0: i32, %arg1: memref<16x128xf32, #tpu.memory_space<vmem>>, %arg2: memref<128x128xbf16, #tpu.memory_space<vmem>>, %arg3: memref<1x128xf32, #tpu.memory_space<vmem>>, %arg4: memref<128x128xbf16, #tpu.memory_space<vmem>>, %arg5: memref<1x128xf32, #tpu.memory_space<vmem>>, %arg6: memref<128x128xbf16, #tpu.memory_space<vmem>>, %arg7: memref<1x128xf32, #tpu.memory_space<vmem>>, %arg8: memref<16x128xf32, #tpu.memory_space<vmem>>) attributes {dimension_semantics = [#tpu.dimension_semantics<parallel>], iteration_bounds = array<i64: 1>, scalar_prefetch = 0 : i64, scratch_operands = 0 : i64, tpu.core_type = #tpu.core_type<tc>, window_params = [{transform_indices = @transform_0, window_bounds = array<i64: 16, 128>}, {pipeline_mode = #tpu.pipeline_mode<synchronous>, transform_indices = @transform_1, window_bounds = array<i64: 128, 128>}, {pipeline_mode = #tpu.pipeline_mode<synchronous>, transform_indices = @transform_2, window_bounds = array<i64: 1, 128>}, {pipeline_mode = #tpu.pipeline_mode<synchronous>, transform_indices = @transform_3, window_bounds = array<i64: 128, 128>}, {pipeline_mode = #tpu.pipeline_mode<synchronous>, transform_indices = @transform_4, window_bounds = array<i64: 1, 128>}, {pipeline_mode = #tpu.pipeline_mode<synchronous>, transform_indices = @transform_5, window_bounds = array<i64: 128, 128>}, {pipeline_mode = #tpu.pipeline_mode<synchronous>, transform_indices = @transform_6, window_bounds = array<i64: 1, 128>}, {transform_indices = @transform_7, window_bounds = array<i64: 16, 128>}]} {
    %c0 = arith.constant 0 : index
    %c0_0 = arith.constant 0 : index
    %0 = vector.load %arg1[%c0, %c0_0] : memref<16x128xf32, #tpu.memory_space<vmem>>, vector<16x128xf32>
    %1 = arith.truncf %0 : vector<16x128xf32> to vector<16x128xbf16>
    %c0_1 = arith.constant 0 : index
    %c0_2 = arith.constant 0 : index
    %2 = vector.load %arg2[%c0_1, %c0_2] : memref<128x128xbf16, #tpu.memory_space<vmem>>, vector<128x128xbf16>
    %cst = arith.constant dense<0.000000e+00> : vector<16x128xf32>
    %3 = tpu.matmul %1, %2, %cst {dimension_numbers = #tpu.dot_dimension_numbers<[1], [0], [0], [1], [0, 0, 1, 1], [], []>} : vector<16x128xbf16>, vector<128x128xbf16>, vector<16x128xf32> -> vector<16x128xf32>
    %c0_3 = arith.constant 0 : index
    %c0_4 = arith.constant 0 : index
    %4 = vector.load %arg3[%c0_3, %c0_4] : memref<1x128xf32, #tpu.memory_space<vmem>>, vector<1x128xf32>
    %5 = vector.broadcast %4 : vector<1x128xf32> to vector<16x128xf32>
    %6 = arith.addf %3, %5 : vector<16x128xf32>
    %cst_5 = arith.constant 0.000000e+00 : f32
    %7 = vector.broadcast %cst_5 : f32 to vector<16x128xf32>
    %8 = arith.maximumf %6, %7 : vector<16x128xf32>
    %9 = arith.truncf %8 : vector<16x128xf32> to vector<16x128xbf16>
    %c0_6 = arith.constant 0 : index
    %c0_7 = arith.constant 0 : index
    %10 = vector.load %arg4[%c0_6, %c0_7] : memref<128x128xbf16, #tpu.memory_space<vmem>>, vector<128x128xbf16>
    %cst_8 = arith.constant dense<0.000000e+00> : vector<16x128xf32>
    %11 = tpu.matmul %9, %10, %cst_8 {dimension_numbers = #tpu.dot_dimension_numbers<[1], [0], [0], [1], [0, 0, 1, 1], [], []>} : vector<16x128xbf16>, vector<128x128xbf16>, vector<16x128xf32> -> vector<16x128xf32>
    %c0_9 = arith.constant 0 : index
    %c0_10 = arith.constant 0 : index
    %12 = vector.load %arg5[%c0_9, %c0_10] : memref<1x128xf32, #tpu.memory_space<vmem>>, vector<1x128xf32>
    %13 = vector.broadcast %12 : vector<1x128xf32> to vector<16x128xf32>
    %14 = arith.addf %11, %13 : vector<16x128xf32>
    %cst_11 = arith.constant 0.000000e+00 : f32
    %15 = vector.broadcast %cst_11 : f32 to vector<16x128xf32>
    %16 = arith.maximumf %14, %15 : vector<16x128xf32>
    %17 = arith.truncf %16 : vector<16x128xf32> to vector<16x128xbf16>
    %c0_12 = arith.constant 0 : index
    %c0_13 = arith.constant 0 : index
    %18 = vector.load %arg6[%c0_12, %c0_13] : memref<128x128xbf16, #tpu.memory_space<vmem>>, vector<128x128xbf16>
    %cst_14 = arith.constant dense<0.000000e+00> : vector<16x128xf32>
    %19 = tpu.matmul %17, %18, %cst_14 {dimension_numbers = #tpu.dot_dimension_numbers<[1], [0], [0], [1], [0, 0, 1, 1], [], []>} : vector<16x128xbf16>, vector<128x128xbf16>, vector<16x128xf32> -> vector<16x128xf32>
    %c0_15 = arith.constant 0 : index
    %c0_16 = arith.constant 0 : index
    %20 = vector.load %arg7[%c0_15, %c0_16] : memref<1x128xf32, #tpu.memory_space<vmem>>, vector<1x128xf32>
    %21 = vector.broadcast %20 : vector<1x128xf32> to vector<16x128xf32>
    %22 = arith.addf %19, %21 : vector<16x128xf32>
    %c0_17 = arith.constant 0 : index
    %c0_18 = arith.constant 0 : index
    %23 = vector.load %arg8[%c0_17, %c0_18] : memref<16x128xf32, #tpu.memory_space<vmem>>, vector<16x128xf32>
    tpu.vector_store %arg8[%c0_17, %c0_18], %22 {strides = array<i32>} : memref<16x128xf32, #tpu.memory_space<vmem>>, vector<16x128xf32>,
    return
  }
  func.func @transform_0(%arg0: i32) -> (i32, i32) {
    %c0_i32 = arith.constant 0 : i32
    %c0_i32_0 = arith.constant 0 : i32
    return %arg0, %c0_i32 : i32, i32
  }
  func.func @transform_1(%arg0: i32) -> (i32, i32) {
    %c0_i32 = arith.constant 0 : i32
    %c0_i32_0 = arith.constant 0 : i32
    %c0_i32_1 = arith.constant 0 : i32
    return %c0_i32, %c0_i32_0 : i32, i32
  }
  func.func @transform_2(%arg0: i32) -> (i32, i32) {
    %c0_i32 = arith.constant 0 : i32
    %c0_i32_0 = arith.constant 0 : i32
    %c0_i32_1 = arith.constant 0 : i32
    return %c0_i32, %c0_i32_0 : i32, i32
  }
  func.func @transform_3(%arg0: i32) -> (i32, i32) {
    %c0_i32 = arith.constant 0 : i32
    %c0_i32_0 = arith.constant 0 : i32
    %c0_i32_1 = arith.constant 0 : i32
    return %c0_i32, %c0_i32_0 : i32, i32
  }
  func.func @transform_4(%arg0: i32) -> (i32, i32) {
    %c0_i32 = arith.constant 0 : i32
    %c0_i32_0 = arith.constant 0 : i32
    %c0_i32_1 = arith.constant 0 : i32
    return %c0_i32, %c0_i32_0 : i32, i32
  }
  func.func @transform_5(%arg0: i32) -> (i32, i32) {
    %c0_i32 = arith.constant 0 : i32
    %c0_i32_0 = arith.constant 0 : i32
    %c0_i32_1 = arith.constant 0 : i32
    return %c0_i32, %c0_i32_0 : i32, i32
  }
  func.func @transform_6(%arg0: i32) -> (i32, i32) {
    %c0_i32 = arith.constant 0 : i32
    %c0_i32_0 = arith.constant 0 : i32
    %c0_i32_1 = arith.constant 0 : i32
    return %c0_i32, %c0_i32_0 : i32, i32
  }
  func.func @transform_7(%arg0: i32) -> (i32, i32) {
    %c0_i32 = arith.constant 0 : i32
    %c0_i32_0 = arith.constant 0 : i32
    return %arg0, %c0_i32 : i32, i32
  }
}

</mosaic_0001>

<llo_original>
// kernel: boltzmann_machine_forward.1
$region0: #{boltzmann_machine_forward.1}
  #allocation0 [shape = 'u32[]', space=smem, size = 0x4, offset = 0x4, fixed_abs, tag = 'smem constant byte address 0x4 - core index']
  #allocation1 [shape = 'u32[144,128]{1,0:T(1,128)}', space=vmem, size = 0x12000, scoped, tag = 'internal scratch']
  %s0 = inlined_call_operand.vmem [shape: f32[16,128], index: 0, kind: input, shape index: {}]
  %s1 = inlined_call_operand.hbm [shape: bf16[128,128], index: 1, kind: input, shape index: {}]
  %s2 = inlined_call_operand.vmem [shape: f32[1,128], index: 2, kind: input, shape index: {}]
  %s3 = inlined_call_operand.hbm [shape: bf16[128,128], index: 3, kind: input, shape index: {}]
  %s4 = inlined_call_operand.vmem [shape: f32[1,128], index: 4, kind: input, shape index: {}]
  %s5 = inlined_call_operand.hbm [shape: bf16[128,128], index: 5, kind: input, shape index: {}]
  %s6 = inlined_call_operand.vmem [shape: f32[1,128], index: 6, kind: input, shape index: {}]
  %s7 = inlined_call_operand.vmem [shape: f32[16,128], index: 7, kind: output, shape index: {}]
  %s8 = sld [smem:[#allocation0]]
  $region50: #{boltzmann_machine_forward.1} parent=0
    _
  %s10 = ssub.s32 1, %s8
  %s11 = scalar_select 0, %s10, %s8
  $region1: #{boltzmann_machine_forward.1} parent=0
    #allocation2 [shape = 'u8[32768]{0}', space=vmem, size = 0x8000, scoped, tag = 'input window, operand 1, single buffered']
    #allocation3 [shape = 's32[1]{0}', space=sflag, size = 0x4, scoped, tag = 'scoped memory for boltzmann_machine_forward.1']
    #allocation4 [shape = 'u8[32768]{0}', space=vmem, size = 0x8000, scoped, tag = 'input window, operand 3, single buffered']
    #allocation5 [shape = 's32[1]{0}', space=sflag, size = 0x4, scoped, tag = 'scoped memory for boltzmann_machine_forward.1']
    #allocation6 [shape = 'u8[32768]{0}', space=vmem, size = 0x8000, scoped, tag = 'input window, operand 5, single buffered']
    %12 = vsyncpa [#allocation3], 0
    %13 = vsyncpa [#allocation5], 0
    // Predicated region
    $region2: #{boltzmann_machine_forward.1} parent=1 // pred_check
      _
    $region3: #{boltzmann_machine_forward.1} parent=1 // pred_check_branch
      %15 = sbr.rel (0) target = $region5
    $region4: #{boltzmann_machine_forward.1} parent=1 // pred_region
      _
    $region5: #{boltzmann_machine_forward.1} parent=1 // pred_fallthru
      _
    // Predicated region
    $region6: #{boltzmann_machine_forward.1} parent=1 // pred_check
      _
    $region7: #{boltzmann_machine_forward.1} parent=1 // pred_check_branch
      %17 = sbr.rel (0) target = $region9
    $region8: #{boltzmann_machine_forward.1} parent=1 // pred_region
      %s19 = ssub.s32 1024, 1024
      %20 = vsyncadd [#allocation3], %s19
      %s21 = sshll.u32 [#allocation2], 4
      %s22 = int_to_ptr.vmem [resolvable:$true] %s21
      %27 = dma.hbm_to_vmem [thread:$0]  %s1, 1024, %s22, [#allocation3], 64, 64, 4
    $region9: #{boltzmann_machine_forward.1} parent=1 // pred_fallthru
      _
    // Predicated region
    $region10: #{boltzmann_machine_forward.1} parent=1 // pred_check
      _
    $region11: #{boltzmann_machine_forward.1} parent=1 // pred_check_branch
      %29 = sbr.rel (0) target = $region13
    $region12: #{boltzmann_machine_forward.1} parent=1 // pred_region
      _
    $region13: #{boltzmann_machine_forward.1} parent=1 // pred_fallthru
      _
    // Predicated region
    $region14: #{boltzmann_machine_forward.1} parent=1 // pred_check
      _
    $region15: #{boltzmann_machine_forward.1} parent=1 // pred_check_branch
      %31 = sbr.rel (0) target = $region17
    $region16: #{boltzmann_machine_forward.1} parent=1 // pred_region
      %s33 = ssub.s32 1024, 1024
      %34 = vsyncadd [#allocation5], %s33
      %s35 = sshll.u32 [#allocation4], 4
      %s36 = int_to_ptr.vmem [resolvable:$true] %s35
      %41 = dma.hbm_to_vmem [thread:$0]  %s3, 1024, %s36, [#allocation5], 64, 64, 4
    $region17: #{boltzmann_machine_forward.1} parent=1 // pred_fallthru
      _
    // Predicated region
    $region18: #{boltzmann_machine_forward.1} parent=1 // pred_check
      _
    $region19: #{boltzmann_machine_forward.1} parent=1 // pred_check_branch
      %43 = sbr.rel (0) target = $region21
    $region20: #{boltzmann_machine_forward.1} parent=1 // pred_region
      _
    $region21: #{boltzmann_machine_forward.1} parent=1 // pred_fallthru
      _
    // Predicated region
    $region22: #{boltzmann_machine_forward.1} parent=1 // pred_check
      _
    $region23: #{boltzmann_machine_forward.1} parent=1 // pred_check_branch
      %45 = sbr.rel (0) target = $region25
    $region24: #{boltzmann_machine_forward.1} parent=1 // pred_region
      %s47 = ssub.s32 1024, 1024
      %48 = vsyncadd [#allocation5], %s47
      %s49 = sshll.u32 [#allocation6], 4
      %s50 = int_to_ptr.vmem [resolvable:$true] %s49
      %55 = dma.hbm_to_vmem [thread:$0]  %s5, 1024, %s50, [#allocation5], 64, 64, 4
    $region25: #{boltzmann_machine_forward.1} parent=1 // pred_fallthru
      _
    // Predicated region
    $region26: #{boltzmann_machine_forward.1} parent=1 // pred_check
      _
    $region27: #{boltzmann_machine_forward.1} parent=1 // pred_check_branch
      %57 = sbr.rel (0) target = $region29
    $region28: #{boltzmann_machine_forward.1} parent=1 // pred_region
      _
    $region29: #{boltzmann_machine_forward.1} parent=1 // pred_fallthru
      _
    // Predicated region
    $region30: #{boltzmann_machine_forward.1} parent=1 // pred_check
      _
    $region31: #{boltzmann_machine_forward.1} parent=1 // pred_check_branch
      %59 = sbr.rel (0) target = $region33
    $region32: #{boltzmann_machine_forward.1} parent=1 // pred_region
      %60 = dma.done [#allocation3], 1024
    $region33: #{boltzmann_machine_forward.1} parent=1 // pred_fallthru
      _
    // Predicated region
    $region34: #{boltzmann_machine_forward.1} parent=1 // pred_check
      _
    $region35: #{boltzmann_machine_forward.1} parent=1 // pred_check_branch
      %62 = sbr.rel (0) target = $region37
    $region36: #{boltzmann_machine_forward.1} parent=1 // pred_region
      %63 = dma.done [#allocation5], 1024
    $region37: #{boltzmann_machine_forward.1} parent=1 // pred_fallthru
      _
    // Predicated region
    $region38: #{boltzmann_machine_forward.1} parent=1 // pred_check
      _
    $region39: #{boltzmann_machine_forward.1} parent=1 // pred_check_branch
      %65 = sbr.rel (0) target = $region41
    $region40: #{boltzmann_machine_forward.1} parent=1 // pred_region
      %66 = dma.done [#allocation5], 1024
    $region41: #{boltzmann_machine_forward.1} parent=1 // pred_fallthru
      _
    %v68 = vld [vmem:[%s0] sm:$0xff]
    %v69 = vld [vmem:[%s0 + $0x8] sm:$0xff]
    %v70 = vpack.c.bf16 %v69, %v68
    %v71 = vld [vmem:[#allocation2] sm:$0xf]
    %v72 = vld [vmem:[#allocation2 + $0x4] sm:$0xf]
    %v73 = vld [vmem:[#allocation2 + $0x8] sm:$0xf]
    %v74 = vld [vmem:[#allocation2 + $0xc] sm:$0xf]
    %v75 = vld [vmem:[#allocation2 + $0x10] sm:$0xf]
    %v76 = vld [vmem:[#allocation2 + $0x14] sm:$0xf]
    %v77 = vld [vmem:[#allocation2 + $0x18] sm:$0xf]
    %v78 = vld [vmem:[#allocation2 + $0x1c] sm:$0xf]
    %v79 = vld [vmem:[#allocation2 + $0x20] sm:$0xf]
    %v80 = vld [vmem:[#allocation2 + $0x24] sm:$0xf]
    %v81 = vld [vmem:[#allocation2 + $0x28] sm:$0xf]
    %v82 = vld [vmem:[#allocation2 + $0x2c] sm:$0xf]
    %v83 = vld [vmem:[#allocation2 + $0x30] sm:$0xf]
    %v84 = vld [vmem:[#allocation2 + $0x34] sm:$0xf]
    %v85 = vld [vmem:[#allocation2 + $0x38] sm:$0xf]
    %v86 = vld [vmem:[#allocation2 + $0x3c] sm:$0xf]
    %v87 = vld [vmem:[%s2] sm:$0x1]
    %v89 = vlaneseq
    %v90 = vshrl.u32 %v89, 7
    %v91 = vsub.s32 0, %v90
    %v92 = vrot.slane %v87, %v91
    %v110 = vunpack.c.l.b16 %v71
    %v111 = vunpack.c.l.b16 %v72
    %v112 = vunpack.c.l.b16 %v73
    %v113 = vunpack.c.l.b16 %v74
    %v114 = vunpack.c.l.b16 %v75
    %v115 = vunpack.c.l.b16 %v76
    %v116 = vunpack.c.l.b16 %v77
    %v117 = vunpack.c.l.b16 %v78
    %v118 = vunpack.c.l.b16 %v79
    %v119 = vunpack.c.l.b16 %v80
    %v120 = vunpack.c.l.b16 %v81
    %v121 = vunpack.c.l.b16 %v82
    %v122 = vunpack.c.l.b16 %v83
    %v123 = vunpack.c.l.b16 %v84
    %v124 = vunpack.c.l.b16 %v85
    %v125 = vunpack.c.l.b16 %v86
    %v126 = vpack.c.b16 %v111, %v110
    %v127 = vpack.c.b16 %v113, %v112
    %v128 = vpack.c.b16 %v115, %v114
    %v129 = vpack.c.b16 %v117, %v116
    %v130 = vpack.c.b16 %v119, %v118
    %v131 = vpack.c.b16 %v121, %v120
    %v132 = vpack.c.b16 %v123, %v122
    %v133 = vpack.c.b16 %v125, %v124
    %142 = vmatprep.subr.bf16.mxu0 0
    %143 = vmatpush1.bf16.msra.mxu0 %v126
    %144 = vmatprep.subr.bf16.mxu0 0
    %145 = vmatpush1.bf16.msra.mxu0 %v127
    %146 = vmatprep.subr.bf16.mxu0 0
    %147 = vmatpush1.bf16.msra.mxu0 %v128
    %148 = vmatprep.subr.bf16.mxu0 0
    %149 = vmatpush1.bf16.msra.mxu0 %v129
    %150 = vmatprep.subr.bf16.mxu0 0
    %151 = vmatpush1.bf16.msra.mxu0 %v130
    %152 = vmatprep.subr.bf16.mxu0 0
    %153 = vmatpush1.bf16.msra.mxu0 %v131
    %154 = vmatprep.subr.bf16.mxu0 0
    %155 = vmatpush1.bf16.msra.mxu0 %v132
    %156 = vmatprep.subr.bf16.mxu0 0
    %157 = vmatpush1.bf16.msra.mxu0 %v133
    %158 = vmatprep.subr.bf16.mxu0 0
    %159 = vmatpush1.bf16.msra.mxu0 0
    %160 = vmatprep.subr.bf16.mxu0 0
    %161 = vmatpush1.bf16.msra.mxu0 0
    %162 = vmatprep.subr.bf16.mxu0 0
    %163 = vmatpush1.bf16.msra.mxu0 0
    %164 = vmatprep.subr.bf16.mxu0 0
    %165 = vmatpush1.bf16.msra.mxu0 0
    %166 = vmatprep.subr.bf16.mxu0 0
    %167 = vmatpush1.bf16.msra.mxu0 0
    %168 = vmatprep.subr.bf16.mxu0 0
    %169 = vmatpush1.bf16.msra.mxu0 0
    %170 = vmatprep.subr.bf16.mxu0 0
    %171 = vmatpush1.bf16.msra.mxu0 0
    %172 = vmatprep.subr.bf16.mxu0 0
    %173 = vmatpush1.bf16.msra.mxu0 0
    %174 = vmatprep.mubr.bf16.mxu0 0
    %175 = vmatmul.mubr.bf16.gmra.mrb[0].mxu0 %v70
    %v176 = vpop.f32.mrb[0].mxu0
    %v177 = vadd.f32 %v92, %v176
    %v178 = vpop.f32.mrb[0].mxu0
    %v179 = vpop.f32.mrb[0].mxu0
    %v180 = vadd.f32 %v92, %v179
    %v181 = vpop.f32.mrb[0].mxu0
    %182 = vdwg.mxu0
    %v183 = vmax.f32 %v177, 0.0
    %v184 = vmax.f32 %v180, 0.0
    %v185 = vpack.c.bf16 %v184, %v183
    %v186 = vld [vmem:[#allocation4] sm:$0xf]
    %v187 = vld [vmem:[#allocation4 + $0x4] sm:$0xf]
    %v188 = vld [vmem:[#allocation4 + $0x8] sm:$0xf]
    %v189 = vld [vmem:[#allocation4 + $0xc] sm:$0xf]
    %v190 = vld [vmem:[#allocation4 + $0x10] sm:$0xf]
    %v191 = vld [vmem:[#allocation4 + $0x14] sm:$0xf]
    %v192 = vld [vmem:[#allocation4 + $0x18] sm:$0xf]
    %v193 = vld [vmem:[#allocation4 + $0x1c] sm:$0xf]
    %v194 = vld [vmem:[#allocation4 + $0x20] sm:$0xf]
    %v195 = vld [vmem:[#allocation4 + $0x24] sm:$0xf]
    %v196 = vld [vmem:[#allocation4 + $0x28] sm:$0xf]
    %v197 = vld [vmem:[#allocation4 + $0x2c] sm:$0xf]
    %v198 = vld [vmem:[#allocation4 + $0x30] sm:$0xf]
    %v199 = vld [vmem:[#allocation4 + $0x34] sm:$0xf]
    %v200 = vld [vmem:[#allocation4 + $0x38] sm:$0xf]
    %v201 = vld [vmem:[#allocation4 + $0x3c] sm:$0xf]
    %v202 = vld [vmem:[%s4] sm:$0x1]
    %v204 = vlaneseq
    %v205 = vshrl.u32 %v204, 7
    %v206 = vsub.s32 0, %v205
    %v207 = vrot.slane %v202, %v206
    %v225 = vunpack.c.l.b16 %v186
    %v226 = vunpack.c.l.b16 %v187
    %v227 = vunpack.c.l.b16 %v188
    %v228 = vunpack.c.l.b16 %v189
    %v229 = vunpack.c.l.b16 %v190
    %v230 = vunpack.c.l.b16 %v191
    %v231 = vunpack.c.l.b16 %v192
    %v232 = vunpack.c.l.b16 %v193
    %v233 = vunpack.c.l.b16 %v194
    %v234 = vunpack.c.l.b16 %v195
    %v235 = vunpack.c.l.b16 %v196
    %v236 = vunpack.c.l.b16 %v197
    %v237 = vunpack.c.l.b16 %v198
    %v238 = vunpack.c.l.b16 %v199
    %v239 = vunpack.c.l.b16 %v200
    %v240 = vunpack.c.l.b16 %v201
    %v241 = vpack.c.b16 %v226, %v225
    %v242 = vpack.c.b16 %v228, %v227
    %v243 = vpack.c.b16 %v230, %v229
    %v244 = vpack.c.b16 %v232, %v231
    %v245 = vpack.c.b16 %v234, %v233
    %v246 = vpack.c.b16 %v236, %v235
    %v247 = vpack.c.b16 %v238, %v237
    %v248 = vpack.c.b16 %v240, %v239
    %257 = vmatprep.subr.bf16.mxu0 0
    %258 = vmatpush1.bf16.msra.mxu0 %v241
    %259 = vmatprep.subr.bf16.mxu0 0
    %260 = vmatpush1.bf16.msra.mxu0 %v242
    %261 = vmatprep.subr.bf16.mxu0 0
    %262 = vmatpush1.bf16.msra.mxu0 %v243
    %263 = vmatprep.subr.bf16.mxu0 0
    %264 = vmatpush1.bf16.msra.mxu0 %v244
    %265 = vmatprep.subr.bf16.mxu0 0
    %266 = vmatpush1.bf16.msra.mxu0 %v245
    %267 = vmatprep.subr.bf16.mxu0 0
    %268 = vmatpush1.bf16.msra.mxu0 %v246
    %269 = vmatprep.subr.bf16.mxu0 0
    %270 = vmatpush1.bf16.msra.mxu0 %v247
    %271 = vmatprep.subr.bf16.mxu0 0
    %272 = vmatpush1.bf16.msra.mxu0 %v248
    %273 = vmatprep.subr.bf16.mxu0 0
    %274 = vmatpush1.bf16.msra.mxu0 0
    %275 = vmatprep.subr.bf16.mxu0 0
    %276 = vmatpush1.bf16.msra.mxu0 0
    %277 = vmatprep.subr.bf16.mxu0 0
    %278 = vmatpush1.bf16.msra.mxu0 0
    %279 = vmatprep.subr.bf16.mxu0 0
    %280 = vmatpush1.bf16.msra.mxu0 0
    %281 = vmatprep.subr.bf16.mxu0 0
    %282 = vmatpush1.bf16.msra.mxu0 0
    %283 = vmatprep.subr.bf16.mxu0 0
    %284 = vmatpush1.bf16.msra.mxu0 0
    %285 = vmatprep.subr.bf16.mxu0 0
    %286 = vmatpush1.bf16.msra.mxu0 0
    %287 = vmatprep.subr.bf16.mxu0 0
    %288 = vmatpush1.bf16.msra.mxu0 0
    %289 = vmatprep.mubr.bf16.mxu0 0
    %290 = vmatmul.mubr.bf16.gmra.mrb[0].mxu0 %v185
    %v291 = vpop.f32.mrb[0].mxu0
    %v292 = vadd.f32 %v207, %v291
    %v293 = vpop.f32.mrb[0].mxu0
    %v294 = vpop.f32.mrb[0].mxu0
    %v295 = vadd.f32 %v207, %v294
    %v296 = vpop.f32.mrb[0].mxu0
    %297 = vdwg.mxu0
    %v298 = vmax.f32 %v292, 0.0
    %v299 = vmax.f32 %v295, 0.0
    %v300 = vpack.c.bf16 %v299, %v298
    %v301 = vld [vmem:[#allocation6] sm:$0xf]
    %v302 = vld [vmem:[#allocation6 + $0x4] sm:$0xf]
    %v303 = vld [vmem:[#allocation6 + $0x8] sm:$0xf]
    %v304 = vld [vmem:[#allocation6 + $0xc] sm:$0xf]
    %v305 = vld [vmem:[#allocation6 + $0x10] sm:$0xf]
    %v306 = vld [vmem:[#allocation6 + $0x14] sm:$0xf]
    %v307 = vld [vmem:[#allocation6 + $0x18] sm:$0xf]
    %v308 = vld [vmem:[#allocation6 + $0x1c] sm:$0xf]
    %v309 = vld [vmem:[#allocation6 + $0x20] sm:$0xf]
    %v310 = vld [vmem:[#allocation6 + $0x24] sm:$0xf]
    %v311 = vld [vmem:[#allocation6 + $0x28] sm:$0xf]
    %v312 = vld [vmem:[#allocation6 + $0x2c] sm:$0xf]
    %v313 = vld [vmem:[#allocation6 + $0x30] sm:$0xf]
    %v314 = vld [vmem:[#allocation6 + $0x34] sm:$0xf]
    %v315 = vld [vmem:[#allocation6 + $0x38] sm:$0xf]
    %v316 = vld [vmem:[#allocation6 + $0x3c] sm:$0xf]
    %v317 = vld [vmem:[%s6] sm:$0x1]
    %v319 = vlaneseq
    %v320 = vshrl.u32 %v319, 7
    %v321 = vsub.s32 0, %v320
    %v322 = vrot.slane %v317, %v321
    %v340 = vunpack.c.l.b16 %v301
    %v341 = vunpack.c.l.b16 %v302
    %v342 = vunpack.c.l.b16 %v303
    %v343 = vunpack.c.l.b16 %v304
    %v344 = vunpack.c.l.b16 %v305
    %v345 = vunpack.c.l.b16 %v306
    %v346 = vunpack.c.l.b16 %v307
    %v347 = vunpack.c.l.b16 %v308
    %v348 = vunpack.c.l.b16 %v309
    %v349 = vunpack.c.l.b16 %v310
    %v350 = vunpack.c.l.b16 %v311
    %v351 = vunpack.c.l.b16 %v312
    %v352 = vunpack.c.l.b16 %v313
    %v353 = vunpack.c.l.b16 %v314
    %v354 = vunpack.c.l.b16 %v315
    %v355 = vunpack.c.l.b16 %v316
    %v356 = vpack.c.b16 %v341, %v340
    %v357 = vpack.c.b16 %v343, %v342
    %v358 = vpack.c.b16 %v345, %v344
    %v359 = vpack.c.b16 %v347, %v346
    %v360 = vpack.c.b16 %v349, %v348
    %v361 = vpack.c.b16 %v351, %v350
    %v362 = vpack.c.b16 %v353, %v352
    %v363 = vpack.c.b16 %v355, %v354
    %372 = vmatprep.subr.bf16.mxu0 0
    %373 = vmatpush1.bf16.msra.mxu0 %v356
    %374 = vmatprep.subr.bf16.mxu0 0
    %375 = vmatpush1.bf16.msra.mxu0 %v357
    %376 = vmatprep.subr.bf16.mxu0 0
    %377 = vmatpush1.bf16.msra.mxu0 %v358
    %378 = vmatprep.subr.bf16.mxu0 0
    %379 = vmatpush1.bf16.msra.mxu0 %v359
    %380 = vmatprep.subr.bf16.mxu0 0
    %381 = vmatpush1.bf16.msra.mxu0 %v360
    %382 = vmatprep.subr.bf16.mxu0 0
    %383 = vmatpush1.bf16.msra.mxu0 %v361
    %384 = vmatprep.subr.bf16.mxu0 0
    %385 = vmatpush1.bf16.msra.mxu0 %v362
    %386 = vmatprep.subr.bf16.mxu0 0
    %387 = vmatpush1.bf16.msra.mxu0 %v363
    %388 = vmatprep.subr.bf16.mxu0 0
    %389 = vmatpush1.bf16.msra.mxu0 0
    %390 = vmatprep.subr.bf16.mxu0 0
    %391 = vmatpush1.bf16.msra.mxu0 0
    %392 = vmatprep.subr.bf16.mxu0 0
    %393 = vmatpush1.bf16.msra.mxu0 0
    %394 = vmatprep.subr.bf16.mxu0 0
    %395 = vmatpush1.bf16.msra.mxu0 0
    %396 = vmatprep.subr.bf16.mxu0 0
    %397 = vmatpush1.bf16.msra.mxu0 0
    %398 = vmatprep.subr.bf16.mxu0 0
    %399 = vmatpush1.bf16.msra.mxu0 0
    %400 = vmatprep.subr.bf16.mxu0 0
    %401 = vmatpush1.bf16.msra.mxu0 0
    %402 = vmatprep.subr.bf16.mxu0 0
    %403 = vmatpush1.bf16.msra.mxu0 0
    %404 = vmatprep.mubr.bf16.mxu0 0
    %405 = vmatmul.mubr.bf16.gmra.mrb[0].mxu0 %v300
    %v406 = vpop.f32.mrb[0].mxu0
    %v407 = vadd.f32 %v322, %v406
    %v408 = vpop.f32.mrb[0].mxu0
    %v409 = vpop.f32.mrb[0].mxu0
    %v410 = vadd.f32 %v322, %v409
    %v411 = vpop.f32.mrb[0].mxu0
    %412 = vdwg.mxu0
    %413 = vst [vmem:[%s7] sm:$0xff] %v407
    %414 = vst [vmem:[%s7 + $0x8] sm:$0xff] %v410
    // Predicated region
    $region42: #{boltzmann_machine_forward.1} parent=1 // pred_check
      _
    $region43: #{boltzmann_machine_forward.1} parent=1 // pred_check_branch
      %416 = sbr.rel (0) target = $region45
    $region44: #{boltzmann_machine_forward.1} parent=1 // pred_region
      _
    $region45: #{boltzmann_machine_forward.1} parent=1 // pred_fallthru
      _
    // Predicated region
    $region46: #{boltzmann_machine_forward.1} parent=1 // pred_check
      _
    $region47: #{boltzmann_machine_forward.1} parent=1 // pred_check_branch
      %418 = sbr.rel (0) target = $region49
    $region48: #{boltzmann_machine_forward.1} parent=1 // pred_region
      _
    $region49: #{boltzmann_machine_forward.1} parent=1 // pred_fallthru
      _
    %419 = vsyncpa [#allocation3], 1
    %420 = vsyncpa [#allocation5], 1

</llo_original>
